<compile_context>
chip_gen: v7x
topology: tpu7x:2x2x1
jax: 0.10.0
libtpu: 0.0.40
codegen_flags: <defaults>
</compile_context>

<pallas_src>
import jax
import jax.numpy as jnp
from jax.experimental import pallas as pl
from jax.experimental.pallas import tpu as pltpu


def fuse_gate_params(w_data, b_data, w_imp, b_imp, *, matmul_dtype=None):
    """One-time parameter prep (hoisted out of the per-call path).

    Accepts PyTorch Conv1d(k=1) weights either as (C_out, C_in, 1) or already
    squeezed to (C_out, C_in).  Returns:
      w_cat: (2*c_half, C_in)  data rows [0:C), importance rows [c_half:c_half+C)
      b_cat: (2*c_half, 1) float32 (bias always accumulated in f32)
    where c_half = C rounded up to a sublane multiple so the in-kernel split of
    the fused matmul result is tile-aligned.  Pass matmul_dtype=jnp.bfloat16 to
    get bf16 MXU inputs (useful on v5e for large C); accumulation stays f32.
    """
    if w_data.ndim == 3:
        w_data = jnp.squeeze(w_data, -1)
    if w_imp.ndim == 3:
        w_imp = jnp.squeeze(w_imp, -1)
    c_out, c_in = w_data.shape
    if matmul_dtype is None:
        matmul_dtype = w_data.dtype
    sub = 16 if jnp.dtype(matmul_dtype).itemsize == 2 else 8
    c_half = ((c_out + sub - 1) // sub) * sub

    w_cat = jnp.zeros((2 * c_half, c_in), matmul_dtype)
    w_cat = w_cat.at[:c_out].set(w_data.astype(matmul_dtype))
    w_cat = w_cat.at[c_half:c_half + c_out].set(w_imp.astype(matmul_dtype))
    b_cat = jnp.zeros((2 * c_half, 1), jnp.float32)
    b_cat = b_cat.at[:c_out, 0].set(b_data.astype(jnp.float32))
    b_cat = b_cat.at[c_half:c_half + c_out, 0].set(b_imp.astype(jnp.float32))
    return w_cat, b_cat


def _make_gate_kernel(n_rows, c_out, c_half):
    """Kernel over a (n_rows, C, tile_l) slab; weights/bias are resident."""

    def kernel(x_ref, w_ref, b_ref, o_ref):
        w = w_ref[...]                     # (2*c_half, C_in)
        b = b_ref[...]                     # (2*c_half, 1), f32
        for r in range(n_rows):            # n_rows is small & static
            x = x_ref[r]                   # (C_in, tile_l)
            if x.dtype != w.dtype:
                x = x.astype(w.dtype)      # e.g. bf16 MXU inputs on v5e
            # One fused MXU matmul for both 1x1 convs; f32 accumulation + bias.
            y = jnp.dot(w, x, preferred_element_type=jnp.float32) + b
            d = y[:c_out]                  # data branch (sublane-aligned start)
            g = y[c_half:c_half + c_out]   # importance branch (aligned start)
            o_ref[r] = (d * jax.nn.sigmoid(g)).astype(o_ref.dtype)

    return kernel


def gate_forward(x_ncl, w_cat, b_cat, *, target_tile_bytes=2 << 20,
                 vmem_budget_bytes=24 << 20):
    """x_ncl: (N, C, L).  w_cat/b_cat from fuse_gate_params.  Returns (N, C, L)."""
    N, C, L = x_ncl.shape
    itemsize = jnp.dtype(x_ncl.dtype).itemsize
    c2 = w_cat.shape[0]
    c_half = c2 // 2
    if w_cat.shape[1] != C or c_half < C:
        raise ValueError("w_cat does not match x channel count")

    # ---- tile sizing -------------------------------------------------------
    # VMEM per lane-column per batch row: double-buffered x+out tiles plus the
    # f32 matmul result and gate temporaries (generous estimate).
    per_lane_row = 4 * C * itemsize + c2 * 4 + 2 * C * 4
    hbm_lane_row = C * itemsize            # input bytes per lane-column per row

    # Lane width so one step moves ~target_tile_bytes of input (128-aligned),
    # capped by the VMEM budget.
    tile_l = max(128, min(8192, target_tile_bytes // max(1, hbm_lane_row)))
    tile_l = (tile_l // 128) * 128
    vmem_cap = max(128, (vmem_budget_bytes // per_lane_row) // 128 * 128)
    tile_l = min(tile_l, vmem_cap)

    if L > tile_l:
        # Long sequences: tile along L.  No pad/slice in the wrapper — the
        # ragged last block reads garbage lanes and its stores are masked.
        bn = 1
        nblk = -(-L // tile_l)             # >= 2, so megacore gets >= 2 blocks
        per_blk = -(-L // nblk)
        tile_l = ((per_blk + 127) // 128) * 128   # rebalance block sizes
    else:
        # Short sequences: whole-L blocks (last dim == full dim, so no 128
        # divisibility requirement); pack several batch rows per grid step to
        # amortize per-step overhead instead of padding lanes.
        tile_l = L
        row_bytes = max(1, L * hbm_lane_row)
        bn = max(1, min(N, target_tile_bytes // row_bytes))
        bn = min(bn, 16)                                   # bound kernel unroll
        bn = min(bn, max(1, vmem_budget_bytes // max(1, L * per_lane_row)))
        if N >= 2:
            bn = min(bn, (N + 1) // 2)     # keep >= 2 grid blocks for megacore

    grid = (-(-N // bn), -(-L // tile_l))
    kernel = _make_gate_kernel(bn, C, c_half)

    return pl.pallas_call(
        kernel,
        out_shape=jax.ShapeDtypeStruct((N, C, L), x_ncl.dtype),
        grid_spec=pltpu.PrefetchScalarGridSpec(
            num_scalar_prefetch=0,
            grid=grid,
            in_specs=[
                pl.BlockSpec((bn, C, tile_l), lambda nb, lb: (nb, 0, lb)),  # x slab
                pl.BlockSpec((c2, C), lambda nb, lb: (0, 0)),   # fused W (resident)
                pl.BlockSpec((c2, 1), lambda nb, lb: (0, 0)),   # fused b (resident)
            ],
            out_specs=pl.BlockSpec((bn, C, tile_l), lambda nb, lb: (nb, 0, lb)),
        ),
        compiler_params=pltpu.CompilerParams(
            dimension_semantics=("parallel", "parallel"),
            vmem_limit_bytes=32 * 1024 * 1024,
        ),
    )(x_ncl, w_cat, b_cat)


def gate_reference(x_ncl, w_data, b_data, w_imp, b_imp):
    # Plain-JAX reference mirroring PyTorch: pointwise conv == channel einsum.
    d = jnp.einsum("ncl,oc->nol", x_ncl, w_data) + b_data[None, :, None]
    g = jnp.einsum("ncl,oc->nol", x_ncl, w_imp) + b_imp[None, :, None]
    return d * jax.nn.sigmoid(g)


def _rand_params(key, c):
    k_wd, k_bd, k_wi, k_bi = jax.random.split(key, 4)
    scale = 1.0 / jnp.sqrt(jnp.float32(c))
    w_d = jax.random.uniform(k_wd, (c, c), jnp.float32, -scale, scale)
    b_d = jax.random.uniform(k_bd, (c,), jnp.float32, -scale, scale)
    w_i = jax.random.uniform(k_wi, (c, c), jnp.float32, -scale, scale)
    b_i = jax.random.uniform(k_bi, (c,), jnp.float32, -scale, scale)
    return w_d, b_d, w_i, b_i


if __name__ == "__main__":
    key = jax.random.PRNGKey(0)
    k_x1, k_x2, k_x3, k_p1, k_p3 = jax.random.split(key, 5)

    # --- primary case: small DPRNN-like shape (short-L path, batch-blocked) ---
    N, C, L = 2, 32, 16
    x = jax.random.normal(k_x1, (N, C, L), dtype=jnp.float32)
    w_d, b_d, w_i, b_i = _rand_params(k_p1, C)
    w_cat, b_cat = fuse_gate_params(w_d, b_d, w_i, b_i)   # one-time param prep

    out = jax.block_until_ready(gate_forward(x, w_cat, b_cat))
    ref = gate_reference(x, w_d, b_d, w_i, b_i)
    assert out.shape == (N, C, L), out.shape
    assert jnp.allclose(out, ref, atol=1e-5, rtol=1e-5), "mismatch (short-L path)"

    # --- L-tiled path with a ragged last block (no wrapper pad/slice) ---------
    L2 = 200
    x2 = jax.random.normal(k_x2, (N, C, L2), dtype=jnp.float32)
    out2 = jax.block_until_ready(
        gate_forward(x2, w_cat, b_cat, target_tile_bytes=128 * C * 4))
    ref2 = gate_reference(x2, w_d, b_d, w_i, b_i)
    assert out2.shape == (N, C, L2), out2.shape
    assert jnp.allclose(out2, ref2, atol=1e-5, rtol=1e-5), "mismatch (ragged-L path)"

    # --- channel count that is not a sublane multiple (padded fused split) ----
    C3 = 20
    x3 = jax.random.normal(k_x3, (N, C3, L), dtype=jnp.float32)
    w_d3, b_d3, w_i3, b_i3 = _rand_params(k_p3, C3)
    w_cat3, b_cat3 = fuse_gate_params(w_d3, b_d3, w_i3, b_i3)
    out3 = jax.block_until_ready(gate_forward(x3, w_cat3, b_cat3))
    ref3 = gate_reference(x3, w_d3, b_d3, w_i3, b_i3)
    assert out3.shape == (N, C3, L), out3.shape
    assert jnp.allclose(out3, ref3, atol=1e-5, rtol=1e-5), "mismatch (odd-C path)"

    print("KERNEL_OK")
</pallas_src>

<mosaic_0001>
module attributes {stable_mosaic.version = 11 : i64} {
  func.func @kernel(%arg0: i32, %arg1: i32, %arg2: memref<1x32x16xf32, #tpu.memory_space<vmem>>, %arg3: memref<64x32xf32, #tpu.memory_space<vmem>>, %arg4: memref<64x1xf32, #tpu.memory_space<vmem>>, %arg5: memref<1x32x16xf32, #tpu.memory_space<vmem>>) attributes {dimension_semantics = [#tpu.dimension_semantics<parallel>, #tpu.dimension_semantics<parallel>], iteration_bounds = array<i64: 2, 1>, scalar_prefetch = 0 : i64, scratch_operands = 0 : i64, tpu.core_type = #tpu.core_type<tc>, window_params = [{transform_indices = @transform_0, window_bounds = array<i64: 1, 32, 16>}, {pipeline_mode = #tpu.pipeline_mode<synchronous>, transform_indices = @transform_1, window_bounds = array<i64: 64, 32>}, {pipeline_mode = #tpu.pipeline_mode<synchronous>, transform_indices = @transform_2, window_bounds = array<i64: 64, 1>}, {transform_indices = @transform_3, window_bounds = array<i64: 1, 32, 16>}]} {
    %c0 = arith.constant 0 : index
    %c0_0 = arith.constant 0 : index
    %0 = vector.load %arg3[%c0, %c0_0] : memref<64x32xf32, #tpu.memory_space<vmem>>, vector<64x32xf32>
    %c0_1 = arith.constant 0 : index
    %c0_2 = arith.constant 0 : index
    %1 = vector.load %arg4[%c0_1, %c0_2] : memref<64x1xf32, #tpu.memory_space<vmem>>, vector<64x1xf32>
    %c0_3 = arith.constant 0 : index
    %c0_4 = arith.constant 0 : index
    %c0_5 = arith.constant 0 : index
    %2 = vector.load %arg2[%c0_3, %c0_4, %c0_5] : memref<1x32x16xf32, #tpu.memory_space<vmem>>, vector<1x32x16xf32>
    %3 = vector.shape_cast %2 : vector<1x32x16xf32> to vector<32x16xf32>
    %cst = arith.constant dense<0.000000e+00> : vector<64x16xf32>
    %4 = tpu.matmul %0, %3, %cst {dimension_numbers = #tpu.dot_dimension_numbers<[1], [0], [0], [1], [0, 0, 1, 1], [], []>} : vector<64x32xf32>, vector<32x16xf32>, vector<64x16xf32> -> vector<64x16xf32>
    %5 = vector.broadcast %1 : vector<64x1xf32> to vector<64x16xf32>
    %6 = arith.addf %4, %5 : vector<64x16xf32>
    %7 = vector.extract_strided_slice %6 {offsets = [0, 0], sizes = [32, 16], strides = [1, 1]} : vector<64x16xf32> to vector<32x16xf32>
    %8 = vector.extract_strided_slice %6 {offsets = [32, 0], sizes = [32, 16], strides = [1, 1]} : vector<64x16xf32> to vector<32x16xf32>
    %9 = arith.negf %8 : vector<32x16xf32>
    %10 = math.exp %9 : vector<32x16xf32>
    %cst_6 = arith.constant 1.000000e+00 : f32
    %11 = vector.broadcast %cst_6 : f32 to vector<32x16xf32>
    %12 = arith.addf %11, %10 : vector<32x16xf32>
    %13 = arith.divf %11, %12 : vector<32x16xf32>
    %14 = arith.mulf %7, %13 : vector<32x16xf32>
    %c0_7 = arith.constant 0 : index
    %c0_8 = arith.constant 0 : index
    %c0_9 = arith.constant 0 : index
    %15 = vector.load %arg5[%c0_7, %c0_8, %c0_9] : memref<1x32x16xf32, #tpu.memory_space<vmem>>, vector<1x32x16xf32>
    %16 = vector.shape_cast %15 : vector<1x32x16xf32> to vector<32x16xf32>
    %17 = vector.shape_cast %14 : vector<32x16xf32> to vector<1x32x16xf32>
    tpu.vector_store %arg5[%c0_7, %c0_8, %c0_9], %17 {strides = array<i32>} : memref<1x32x16xf32, #tpu.memory_space<vmem>>, vector<1x32x16xf32>,
    return
  }
  func.func @transform_0(%arg0: i32, %arg1: i32) -> (i32, i32, i32) {
    %c0_i32 = arith.constant 0 : i32
    %c0_i32_0 = arith.constant 0 : i32
    return %arg0, %c0_i32, %arg1 : i32, i32, i32
  }
  func.func @transform_1(%arg0: i32, %arg1: i32) -> (i32, i32) {
    %c0_i32 = arith.constant 0 : i32
    %c0_i32_0 = arith.constant 0 : i32
    %c0_i32_1 = arith.constant 0 : i32
    return %c0_i32, %c0_i32_0 : i32, i32
  }
  func.func @transform_2(%arg0: i32, %arg1: i32) -> (i32, i32) {
    %c0_i32 = arith.constant 0 : i32
    %c0_i32_0 = arith.constant 0 : i32
    %c0_i32_1 = arith.constant 0 : i32
    return %c0_i32, %c0_i32_0 : i32, i32
  }
  func.func @transform_3(%arg0: i32, %arg1: i32) -> (i32, i32, i32) {
    %c0_i32 = arith.constant 0 : i32
    %c0_i32_0 = arith.constant 0 : i32
    return %arg0, %c0_i32, %arg1 : i32, i32, i32
  }
}

</mosaic_0001>

<llo_original>
// kernel: tpu_custom_call.1
$region0: #{tpu_custom_call.1}
  #allocation0 [shape = 'u32[]', space=smem, size = 0x4, offset = 0x4, fixed_abs, tag = 'smem constant byte address 0x4 - core index']
  #allocation1 [shape = 'u32[144,128]{1,0:T(1,128)}', space=vmem, size = 0x12000, scoped, tag = 'internal scratch']
  %s0 = inlined_call_operand.vmem [shape: f32[2,32,16], index: 0, kind: input, shape index: {}]
  %s1 = inlined_call_operand.vmem [shape: f32[64,32], index: 1, kind: input, shape index: {}]
  %s2 = inlined_call_operand.vmem [shape: f32[64,1], index: 2, kind: input, shape index: {}]
  %s3 = inlined_call_operand.vmem [shape: f32[2,32,16], index: 3, kind: output, shape index: {}]
  %s4 = sld [smem:[#allocation0]]
  $region45: #{tpu_custom_call.1} parent=0
    _
  %s6 = ssub.s32 1, %s4
  %s7 = scalar_select 0, %s6, %s4
  loop: start=0, step=1, limit=4
  $region2: #{tpu_custom_call.1} parent=0 // loop_pre_header
    _
  $region3: #{tpu_custom_call.1} parent=0 // loop_header
    %s9 = sphi 0, %s13
    %p10 = scmp.ge.s32.totalorder %s9, 4
    %s16 = sphi 0, %s28
    %s17 = sphi 0, %s24
    %s18 = sphi 0, %s16
    %s19 = sphi 0, %s17
    %s20 = sphi 0, %s18
    %s21 = sphi 0, %s19
    %s33 = sphi 0, %s35
    %s36 = sphi 0, %s33
    %s37 = sphi 0, %s36
    %s53 = sphi 0, %s37
    %s57 = sphi 0, %s57
    %s59 = sphi 0, %s57
    %s60 = sphi 0, %s59
    %s74 = sphi 0, %s60
    %s78 = sphi 0, %s78
    %s80 = sphi 0, %s78
    %s81 = sphi 0, %s80
    %s95 = sphi 0, %s81
    %s103 = sphi 0, %s105
    %s106 = sphi 0, %s103
    %s107 = sphi 0, %s106
    %s123 = sphi 0, %s107
  $region4: #{tpu_custom_call.1} parent=0 // loop_header_branch
    %12 = sbr.rel (%p10) target = $region8
  $region5: #{tpu_custom_call.1} parent=0 // loop_body
    %s14 = ssub.s32 %s9, 1
    %s15 = ssub.s32 %s9, 2
    %s22 = sadd.s32 1, %s17
    %p23 = scmp.ge.s32.totalorder %s22, 1
    %s24 = scalar_select %p23, 0, %s22
    %s25 = sadd.s32 1, %s16
    %s26 = scalar_select %p23, %s25, %s16
    %p27 = scmp.ge.s32.totalorder %s26, 2
    %s28 = scalar_select %p27, 0, %s26
    %s29 = ssub.s32 %s16, %s28
    %s30 = ssub.s32 %s17, %s24
    %s31 = sor.u32 %s29, %s30
    %p32 = scmp.eq.s32.totalorder %s31, 0
    %s34 = sadd.s32 %s33, 1
    %s35 = scalar_select %p32, %s33, %s34
    %p38 = pneg %p32
    %p39 = scmp.eq.s32.totalorder %s9, 1
    %p40 = por %p38, %p39
    %p41 = scmp.ne.s32.totalorder %s33, %s36
    %p42 = scmp.eq.s32.totalorder %s9, 0
    %p43 = por %p41, %p42
    %p44 = scmp.ne.s32.totalorder %s33, %s36
    %p45 = scmp.eq.s32.totalorder %s14, 1
    %p46 = por %p44, %p45
    %p47 = scmp.ne.s32.totalorder %s36, %s37
    %p48 = scmp.eq.s32.totalorder %s14, 0
    %p49 = por %p47, %p48
    %p50 = scmp.ne.s32.totalorder %s36, %s37
    %p51 = scmp.eq.s32.totalorder %s15, 1
    %p52 = por %p50, %p51
    %p54 = scmp.ne.s32.totalorder %s37, %s53
    %p55 = scmp.eq.s32.totalorder %s15, 0
    %p56 = por %p54, %p55
    %s58 = sadd.s32 %s57, 1
    %p61 = scmp.eq.s32.totalorder %s9, 1
    %p62 = scmp.ne.s32.totalorder %s57, %s59
    %p63 = scmp.eq.s32.totalorder %s9, 0
    %p64 = por %p62, %p63
    %p65 = scmp.ne.s32.totalorder %s57, %s59
    %p66 = scmp.eq.s32.totalorder %s14, 1
    %p67 = por %p65, %p66
    %p68 = scmp.ne.s32.totalorder %s59, %s60
    %p69 = scmp.eq.s32.totalorder %s14, 0
    %p70 = por %p68, %p69
    %p71 = scmp.ne.s32.totalorder %s59, %s60
    %p72 = scmp.eq.s32.totalorder %s15, 1
    %p73 = por %p71, %p72
    %p75 = scmp.ne.s32.totalorder %s60, %s74
    %p76 = scmp.eq.s32.totalorder %s15, 0
    %p77 = por %p75, %p76
    %s79 = sadd.s32 %s78, 1
    %p82 = scmp.eq.s32.totalorder %s9, 1
    %p83 = scmp.ne.s32.totalorder %s78, %s80
    %p84 = scmp.eq.s32.totalorder %s9, 0
    %p85 = por %p83, %p84
    %p86 = scmp.ne.s32.totalorder %s78, %s80
    %p87 = scmp.eq.s32.totalorder %s14, 1
    %p88 = por %p86, %p87
    %p89 = scmp.ne.s32.totalorder %s80, %s81
    %p90 = scmp.eq.s32.totalorder %s14, 0
    %p91 = por %p89, %p90
    %p92 = scmp.ne.s32.totalorder %s80, %s81
    %p93 = scmp.eq.s32.totalorder %s15, 1
    %p94 = por %p92, %p93
    %p96 = scmp.ne.s32.totalorder %s81, %s95
    %p97 = scmp.eq.s32.totalorder %s15, 0
    %p98 = por %p96, %p97
    %s99 = ssub.s32 %s16, %s28
    %s100 = ssub.s32 %s17, %s24
    %s101 = sor.u32 %s99, %s100
    %p102 = scmp.eq.s32.totalorder %s101, 0
    %s104 = sadd.s32 %s103, 1
    %s105 = scalar_select %p102, %s103, %s104
    %p108 = pneg %p102
    %p109 = scmp.eq.s32.totalorder %s9, 1
    %p110 = por %p108, %p109
    %p111 = scmp.ne.s32.totalorder %s103, %s106
    %p112 = scmp.eq.s32.totalorder %s9, 0
    %p113 = por %p111, %p112
    %p114 = scmp.ne.s32.totalorder %s103, %s106
    %p115 = scmp.eq.s32.totalorder %s14, 1
    %p116 = por %p114, %p115
    %p117 = scmp.ne.s32.totalorder %s106, %s107
    %p118 = scmp.eq.s32.totalorder %s14, 0
    %p119 = por %p117, %p118
    %p120 = scmp.ne.s32.totalorder %s106, %s107
    %p121 = scmp.eq.s32.totalorder %s15, 1
    %p122 = por %p120, %p121
    %p124 = scmp.ne.s32.totalorder %s107, %s123
    %p125 = scmp.eq.s32.totalorder %s15, 0
    %p126 = por %p124, %p125
    %p127 = scmp.le.s32.totalorder 1, %s9
    %p128 = scmp.lt.s32.totalorder %s9, 3
    %p129 = pnand %p127, %p128
    %p130 = pneg %p129
    // Predicated region
    $region9: #{tpu_custom_call.1} parent=5 // pred_check
      _
    $region10: #{tpu_custom_call.1} parent=5 // pred_check_branch
      %132 = sbr.rel (%p129) target = $region12
    $region11: #{tpu_custom_call.1} parent=5 // pred_region
      %s133 = ssub.s32 %s9, 1
      // Predicated region
      $region13: #{tpu_custom_call.1} parent=11 // pred_check
        %p134 = pneg %p70
      $region14: #{tpu_custom_call.1} parent=11 // pred_check_branch
        %136 = sbr.rel (%p134) target = $region16
      $region15: #{tpu_custom_call.1} parent=11 // pred_region
        _
      $region16: #{tpu_custom_call.1} parent=11 // pred_fallthru
        _
      // Predicated region
      $region17: #{tpu_custom_call.1} parent=11 // pred_check
        %p137 = pneg %p91
      $region18: #{tpu_custom_call.1} parent=11 // pred_check_branch
        %139 = sbr.rel (%p137) target = $region20
      $region19: #{tpu_custom_call.1} parent=11 // pred_region
        _
      $region20: #{tpu_custom_call.1} parent=11 // pred_fallthru
        _
    $region12: #{tpu_custom_call.1} parent=5 // pred_fallthru
      _
    %p140 = scmp.lt.s32.totalorder %s9, 2
    // Predicated region
    $region21: #{tpu_custom_call.1} parent=5 // pred_check
      %p141 = pneg %p140
    $region22: #{tpu_custom_call.1} parent=5 // pred_check_branch
      %143 = sbr.rel (%p141) target = $region24
    $region23: #{tpu_custom_call.1} parent=5 // pred_region
      // Predicated region
      $region25: #{tpu_custom_call.1} parent=23 // pred_check
        %p144 = pneg %p43
      $region26: #{tpu_custom_call.1} parent=23 // pred_check_branch
        %146 = sbr.rel (%p144) target = $region28
      $region27: #{tpu_custom_call.1} parent=23 // pred_region
        %p147 = scmp.lt.s32.totalorder %s16, 1
        %s148 = scalar_select %p147, %s16, 1
        %p149 = scmp.lt.s32.totalorder %s17, 0
        %s150 = scalar_select %p149, %s17, 0
        %s151 = smul.addr %s148, 4
        %s152 = sadd.s32 %s150, %s151
        %s153 = smul.addr %s152, 8
        %s154 = scalar_lea.vmem %s0, %s153
      $region28: #{tpu_custom_call.1} parent=23 // pred_fallthru
        _
    $region24: #{tpu_custom_call.1} parent=5 // pred_fallthru
      _
    %p155 = scmp.le.s32.totalorder 1, %s9
    %p156 = scmp.lt.s32.totalorder %s9, 3
    %p157 = pnand %p155, %p156
    %p158 = pneg %p157
    // Predicated region
    $region29: #{tpu_custom_call.1} parent=5 // pred_check
      _
    $region30: #{tpu_custom_call.1} parent=5 // pred_check_branch
      %160 = sbr.rel (%p157) target = $region32
    $region31: #{tpu_custom_call.1} parent=5 // pred_region
      %s161 = ssub.s32 %s9, 1
      %p162 = scmp.lt.s32.totalorder %s18, 1
      %s163 = scalar_select %p162, %s18, 1
      %p164 = scmp.lt.s32.totalorder %s19, 0
      %s165 = scalar_select %p164, %s19, 0
      %s166 = smul.addr %s163, 4
      %s167 = sadd.s32 %s165, %s166
      %s168 = smul.addr %s167, 8
      %s169 = scalar_lea.vmem %s0, %s168
      %p170 = pneg %p49
      %p171 = pneg %p46
      %p172 = pneg %p70
      %p173 = pneg %p67
      %p174 = pneg %p91
      %p175 = pneg %p88
      %p176 = pneg %p119
      %p177 = pneg %p116
      %p178 = scmp.lt.s32.totalorder %s18, 1
      %s179 = scalar_select %p178, %s18, 1
      %p180 = scmp.lt.s32.totalorder %s19, 0
      %s181 = scalar_select %p180, %s19, 0
      %s182 = smul.addr %s179, 4
      %s183 = sadd.s32 %s181, %s182
      %s184 = smul.addr %s183, 8
      %s185 = scalar_lea.vmem %s3, %s184
      %p186 = scmp.lt.s32.totalorder %s18, 1
      %s187 = scalar_select %p186, %s18, 1
      %p188 = scmp.lt.s32.totalorder %s19, 0
      %s189 = scalar_select %p188, %s19, 0
      %s190 = smul.addr %s187, 4
      %s191 = sadd.s32 %s189, %s190
      %s192 = smul.addr %s191, 8
      %s193 = scalar_lea.vmem %s0, %s192
      %p194 = scmp.lt.s32.totalorder %s18, 1
      %s195 = scalar_select %p194, %s18, 1
      %p196 = scmp.lt.s32.totalorder %s19, 0
      %s197 = scalar_select %p196, %s19, 0
      %s198 = smul.addr %s195, 4
      %s199 = sadd.s32 %s197, %s198
      %s200 = smul.addr %s199, 8
      %s201 = scalar_lea.vmem %s3, %s200
      %v202 = vld [vmem:[%s1] sm:$0xff]
      %v203 = vld [vmem:[%s1 + $0x8] sm:$0xff]
      %v204 = vld [vmem:[%s1 + $0x10] sm:$0xff]
      %v205 = vld [vmem:[%s1 + $0x18] sm:$0xff]
      %v206 = vld [vmem:[%s1 + $0x20] sm:$0xff]
      %v207 = vld [vmem:[%s1 + $0x28] sm:$0xff]
      %v208 = vld [vmem:[%s1 + $0x30] sm:$0xff]
      %v209 = vld [vmem:[%s1 + $0x38] sm:$0xff]
      %v210 = vld [vmem:[%s2] sm:$0xff]
      %v211 = vld [vmem:[%s2 + $0x8] sm:$0xff]
      %v212 = vld [vmem:[%s2 + $0x10] sm:$0xff]
      %v213 = vld [vmem:[%s2 + $0x18] sm:$0xff]
      %v214 = vld [vmem:[%s2 + $0x20] sm:$0xff]
      %v215 = vld [vmem:[%s2 + $0x28] sm:$0xff]
      %v216 = vld [vmem:[%s2 + $0x30] sm:$0xff]
      %v217 = vld [vmem:[%s2 + $0x38] sm:$0xff]
      %v218 = vld [vmem:[%s193] sm:$0xff]
      %v219 = vld [vmem:[%s193 + $0x8] sm:$0xff]
      %v220 = vld [vmem:[%s193 + $0x10] sm:$0xff]
      %v221 = vld [vmem:[%s193 + $0x18] sm:$0xff]
      %223 = vset.pattern.permute.xlu0 0
      %224 = vperm.xlu0 %223, %v210
      %v225 = vpop.permute.xlu0 %224
      %228 = vset.pattern.permute.xlu0 0
      %229 = vperm.xlu0 %228, %v211
      %v230 = vpop.permute.xlu0 %229
      %233 = vset.pattern.permute.xlu0 0
      %234 = vperm.xlu0 %233, %v212
      %v235 = vpop.permute.xlu0 %234
      %238 = vset.pattern.permute.xlu0 0
      %239 = vperm.xlu0 %238, %v213
      %v240 = vpop.permute.xlu0 %239
      %243 = vset.pattern.permute.xlu0 0
      %244 = vperm.xlu0 %243, %v214
      %v245 = vpop.permute.xlu0 %244
      %248 = vset.pattern.permute.xlu0 0
      %249 = vperm.xlu0 %248, %v215
      %v250 = vpop.permute.xlu0 %249
      %253 = vset.pattern.permute.xlu0 0
      %254 = vperm.xlu0 %253, %v216
      %v255 = vpop.permute.xlu0 %254
      %258 = vset.pattern.permute.xlu0 0
      %259 = vperm.xlu0 %258, %v217
      %v260 = vpop.permute.xlu0 %259
      %vm262 = vcmask 261120
      %v264 = vsel %vm262, %v202, 0
      %v267 = vsel %vm262, %v203, 0
      %v270 = vsel %vm262, %v204, 0
      %v273 = vsel %vm262, %v205, 0
      %v276 = vsel %vm262, %v206, 0
      %v279 = vsel %vm262, %v207, 0
      %v282 = vsel %vm262, %v208, 0
      %v285 = vsel %vm262, %v209, 0
      %287 = vmatprep.subr.mxu0 0.0
      %288 = vmatpush1.msra.mxu0 %v218
      %289 = vmatprep.subr.mxu0 0.0
      %290 = vmatpush1.msra.mxu0 %v219
      %291 = vmatprep.subr.mxu0 0.0
      %292 = vmatpush1.msra.mxu0 %v220
      %293 = vmatprep.subr.mxu0 0.0
      %294 = vmatpush1.msra.mxu0 %v221
      %295 = vmatprep.subr.mxu0 0.0
      %296 = vmatpush1.msra.mxu0 0.0
      %297 = vmatprep.subr.mxu0 0.0
      %298 = vmatpush1.msra.mxu0 0.0
      %299 = vmatprep.subr.mxu0 0.0
      %300 = vmatpush1.msra.mxu0 0.0
      %301 = vmatprep.subr.mxu0 0.0
      %302 = vmatpush1.msra.mxu0 0.0
      %303 = vmatprep.subr.mxu0 0.0
      %304 = vmatpush1.msra.mxu0 0.0
      %305 = vmatprep.subr.mxu0 0.0
      %306 = vmatpush1.msra.mxu0 0.0
      %307 = vmatprep.subr.mxu0 0.0
      %308 = vmatpush1.msra.mxu0 0.0
      %309 = vmatprep.subr.mxu0 0.0
      %310 = vmatpush1.msra.mxu0 0.0
      %311 = vmatprep.subr.mxu0 0.0
      %312 = vmatpush1.msra.mxu0 0.0
      %313 = vmatprep.subr.mxu0 0.0
      %314 = vmatpush1.msra.mxu0 0.0
      %315 = vmatprep.subr.mxu0 0.0
      %316 = vmatpush1.msra.mxu0 0.0
      %317 = vmatprep.subr.mxu0 0.0
      %318 = vmatpush1.msra.mxu0 0.0
      %319 = vmatprep.subr.mxu0 0.0
      %320 = vmatpush1.msra.mxu0 0.0
      %321 = vmatprep.subr.mxu0 0.0
      %322 = vmatpush1.msra.mxu0 0.0
      %323 = vmatprep.subr.mxu0 0.0
      %324 = vmatpush1.msra.mxu0 0.0
      %325 = vmatprep.subr.mxu0 0.0
      %326 = vmatpush1.msra.mxu0 0.0
      %327 = vmatprep.subr.mxu0 0.0
      %328 = vmatpush1.msra.mxu0 0.0
      %329 = vmatprep.subr.mxu0 0.0
      %330 = vmatpush1.msra.mxu0 0.0
      %331 = vmatprep.subr.mxu0 0.0
      %332 = vmatpush1.msra.mxu0 0.0
      %333 = vmatprep.subr.mxu0 0.0
      %334 = vmatpush1.msra.mxu0 0.0
      %335 = vmatprep.subr.mxu0 0.0
      %336 = vmatpush1.msra.mxu0 0.0
      %337 = vmatprep.subr.mxu0 0.0
      %338 = vmatpush1.msra.mxu0 0.0
      %339 = vmatprep.subr.mxu0 0.0
      %340 = vmatpush1.msra.mxu0 0.0
      %341 = vmatprep.subr.mxu0 0.0
      %342 = vmatpush1.msra.mxu0 0.0
      %343 = vmatprep.subr.mxu0 0.0
      %344 = vmatpush1.msra.mxu0 0.0
      %345 = vmatprep.subr.mxu0 0.0
      %346 = vmatpush1.msra.mxu0 0.0
      %347 = vmatprep.subr.mxu0 0.0
      %348 = vmatpush1.msra.mxu0 0.0
      %349 = vmatprep.subr.mxu0 0.0
      %350 = vmatpush1.msra.mxu0 0.0
      %351 = vmatprep.mubr.f32.mxu0 0.0
      %352 = vmatmul.mubr.f32.gmra.mrb[0].mxu0 %v264
      %v353 = vpop.f32.mrb[0].mxu0
      %v354 = vadd.f32 %v225, %v353
      %v355 = vpop.f32.mrb[0].mxu0
      %356 = vmatprep.mubr.f32.mxu0 0.0
      %357 = vmatmul.mubr.f32.gmra.mrb[0].mxu0 %v267
      %v358 = vpop.f32.mrb[0].mxu0
      %v359 = vadd.f32 %v230, %v358
      %v360 = vpop.f32.mrb[0].mxu0
      %361 = vmatprep.mubr.f32.mxu0 0.0
      %362 = vmatmul.mubr.f32.gmra.mrb[0].mxu0 %v270
      %v363 = vpop.f32.mrb[0].mxu0
      %v364 = vadd.f32 %v235, %v363
      %v365 = vpop.f32.mrb[0].mxu0
      %366 = vmatprep.mubr.f32.mxu0 0.0
      %367 = vmatmul.mubr.f32.gmra.mrb[0].mxu0 %v273
      %v368 = vpop.f32.mrb[0].mxu0
      %v369 = vadd.f32 %v240, %v368
      %v370 = vpop.f32.mrb[0].mxu0
      %371 = vmatprep.mubr.f32.mxu0 0.0
      %372 = vmatmul.mubr.f32.gmra.mrb[0].mxu0 %v276
      %v373 = vpop.f32.mrb[0].mxu0
      %v374 = vadd.f32 %v245, %v373
      %v375 = vpop.f32.mrb[0].mxu0
      %376 = vmatprep.mubr.f32.mxu0 0.0
      %377 = vmatmul.mubr.f32.gmra.mrb[0].mxu0 %v279
      %v378 = vpop.f32.mrb[0].mxu0
      %v379 = vadd.f32 %v250, %v378
      %v380 = vpop.f32.mrb[0].mxu0
      %381 = vmatprep.mubr.f32.mxu0 0.0
      %382 = vmatmul.mubr.f32.gmra.mrb[0].mxu0 %v282
      %v383 = vpop.f32.mrb[0].mxu0
      %v384 = vadd.f32 %v255, %v383
      %v385 = vpop.f32.mrb[0].mxu0
      %386 = vmatprep.mubr.f32.mxu0 0.0
      %387 = vmatmul.mubr.f32.gmra.mrb[0].mxu0 %v285
      %v388 = vpop.f32.mrb[0].mxu0
      %v389 = vadd.f32 %v260, %v388
      %v390 = vpop.f32.mrb[0].mxu0
      %391 = vdwg.mxu0
      %v392 = vxor.u32 %v374, 2147483648
      %v393 = vxor.u32 %v379, 2147483648
      %v394 = vxor.u32 %v384, 2147483648
      %v395 = vxor.u32 %v389, 2147483648
      %v396 = vmul.f32 %v392, 1.442695
      %v397 = vpow.pop %v396
      %v398 = vmul.f32 %v393, 1.442695
      %v399 = vpow.pop %v398
      %v400 = vmul.f32 %v394, 1.442695
      %v401 = vpow.pop %v400
      %v402 = vmul.f32 %v395, 1.442695
      %v403 = vpow.pop %v402
      %v404 = vadd.f32 %v397, 1.0
      %v405 = vadd.f32 %v399, 1.0
      %v406 = vadd.f32 %v401, 1.0
      %v407 = vadd.f32 %v403, 1.0
      %v408 = vrcp.pop %v404
      %v409 = vmul.f32 1.0, %v408
      %v410 = vrcp.pop %v405
      %v411 = vmul.f32 1.0, %v410
      %v412 = vrcp.pop %v406
      %v413 = vmul.f32 1.0, %v412
      %v414 = vrcp.pop %v407
      %v415 = vmul.f32 1.0, %v414
      %v416 = vmul.f32 %v354, %v409
      %v417 = vmul.f32 %v359, %v411
      %v418 = vmul.f32 %v364, %v413
      %v419 = vmul.f32 %v369, %v415
      %vm420 = vcmask 130048
      %421 = vst.msk [vmem:[%s201] sm:$0xff] %vm420, %v416
      %422 = vst.msk [vmem:[%s201 + $0x8] sm:$0xff] %vm420, %v417
      %423 = vst.msk [vmem:[%s201 + $0x10] sm:$0xff] %vm420, %v418
      %424 = vst.msk [vmem:[%s201 + $0x18] sm:$0xff] %vm420, %v419
      %p425 = scmp.lt.s32.totalorder %s18, 1
      %s426 = scalar_select %p425, %s18, 1
      %p427 = scmp.lt.s32.totalorder %s19, 0
      %s428 = scalar_select %p427, %s19, 0
      %s429 = smul.addr %s426, 4
      %s430 = sadd.s32 %s428, %s429
      %s431 = smul.addr %s430, 8
      %s432 = scalar_lea.vmem %s3, %s431
      // Predicated region
      $region33: #{tpu_custom_call.1} parent=31 // pred_check
        %p433 = pneg %p116
      $region34: #{tpu_custom_call.1} parent=31 // pred_check_branch
        %435 = sbr.rel (%p433) target = $region36
      $region35: #{tpu_custom_call.1} parent=31 // pred_region
        _
      $region36: #{tpu_custom_call.1} parent=31 // pred_fallthru
        _
    $region32: #{tpu_custom_call.1} parent=5 // pred_fallthru
      _
    %p436 = scmp.le.s32.totalorder 2, %s9
    // Predicated region
    $region37: #{tpu_custom_call.1} parent=5 // pred_check
      %p437 = pneg %p436
    $region38: #{tpu_custom_call.1} parent=5 // pred_check_branch
      %439 = sbr.rel (%p437) target = $region40
    $region39: #{tpu_custom_call.1} parent=5 // pred_region
      %s440 = ssub.s32 %s9, 2
      // Predicated region
      $region41: #{tpu_custom_call.1} parent=39 // pred_check
        %p441 = pneg %p122
      $region42: #{tpu_custom_call.1} parent=39 // pred_check_branch
        %443 = sbr.rel (%p441) target = $region44
      $region43: #{tpu_custom_call.1} parent=39 // pred_region
        %p444 = scmp.lt.s32.totalorder %s20, 1
        %s445 = scalar_select %p444, %s20, 1
        %p446 = scmp.lt.s32.totalorder %s21, 0
        %s447 = scalar_select %p446, %s21, 0
        %s448 = smul.addr %s445, 4
        %s449 = sadd.s32 %s447, %s448
        %s450 = smul.addr %s449, 8
        %s451 = scalar_lea.vmem %s3, %s450
      $region44: #{tpu_custom_call.1} parent=39 // pred_fallthru
        _
    $region40: #{tpu_custom_call.1} parent=5 // pred_fallthru
      _
  $region6: #{tpu_custom_call.1} parent=0 // loop_footer
    %s13 = sadd.s32 1, %s9
  $region7: #{tpu_custom_call.1} parent=0 // loop_footer_branch
    %8 = sbr.rel target = $region3
  $region8: #{tpu_custom_call.1} parent=0 // loop_exit
    _

</llo_original>
